<compile_context>
chip_gen: v5e
topology: v5e:2x2
jax: 0.10.0
libtpu: 0.0.40
codegen_flags: <defaults>
</compile_context>

<pallas_src>
import math

import jax
import jax.numpy as jnp
from jax.experimental import pallas as pl
from jax.experimental.pallas import tpu as pltpu

_LANE = 128  # vreg lane width (last dim)


def _copy_kernel(x_ref, o_ref):
    # Identity copy of the current (block_rows, 128) lane-dense block.
    o_ref[...] = x_ref[...]


def _resolve_target_shape(in_shape, target_shape):
    """torch.view semantics: keep batch dim, resolve at most one -1, validate count."""
    b = in_shape[0]
    feat = math.prod(in_shape[1:]) if len(in_shape) > 1 else 1
    tgt = list(target_shape)
    if tgt.count(-1) > 1:
        raise ValueError("only one -1 is allowed in the target shape")
    if -1 in tgt:
        known = 1
        for d in tgt:
            if d != -1:
                known *= d
        if known == 0 or feat % known != 0:
            raise ValueError(
                f"cannot reshape {feat} trailing elements into {tuple(target_shape)}")
        tgt[tgt.index(-1)] = feat // known
    if math.prod(tgt) != feat:
        raise ValueError(
            f"target shape {tuple(target_shape)} is incompatible with {feat} trailing elements")
    return (b, *tgt)


def _sublane_align(itemsize):
    # 8 rows per 32-bit vreg; sub-32-bit dtypes pack more rows per sublane
    # (bf16 -> 16, int8/fp8 -> 32).  Align block seams to the packed tile.
    return max(8, 32 // max(1, itemsize))


def _pick_block_bytes():
    # Generation-aware block size.  v7x's ~3.2 TB/s HBM moves 1 MiB in well
    # under the ~0.35 us per-grid-step overhead, so use bigger blocks there.
    try:
        kind = jax.devices()[0].device_kind.lower()
    except Exception:  # pragma: no cover - defensive, e.g. no devices yet
        kind = ""
    if "v7" in kind:
        return 4 << 20
    return 2 << 20  # v5e / v6e: >=86% of HBM roofline, trivially inside scoped VMEM


def pallas_reshape(x, target_shape, *, materialize=True, small_fast_path_bytes=2 << 20):
    """Equivalent of Reshape(target_shape)(x) == x.view((x.shape[0], *target_shape))."""
    out_shape = _resolve_target_shape(x.shape, target_shape)

    if not materialize:
        # Reshape of a contiguous array is zero-cost metadata: no kernel, no HBM traffic.
        return jnp.reshape(x, out_shape)

    dtype = x.dtype
    itemsize = jnp.dtype(dtype).itemsize
    total = math.prod(x.shape)

    if total == 0 or total * itemsize < small_fast_path_bytes:
        # Tiny tensors: kernel launch + single grid step fixed cost dominates;
        # the plain XLA reshape/copy is strictly faster.
        return jnp.reshape(x, out_shape)

    # Lane-dense slab: flatten everything to (rows, 128) so every vreg row /
    # DMA row is fully used (no sublane padding, no masked vst.msk).
    rows = -(-total // _LANE)
    sub = _sublane_align(itemsize)

    target_block_bytes = _pick_block_bytes()
    block_rows = max(sub, min(target_block_bytes // (_LANE * itemsize), rows))
    block_rows = -(-block_rows // sub) * sub          # align to packed sublane tile
    block_bytes = block_rows * _LANE * itemsize

    padded_total = rows * _LANE
    flat = jnp.reshape(x, (total,))
    if padded_total != total:
        # Only non-128-multiple element counts pay this one pad pass (and the
        # matching trailing slice below, which keeps the total-element invariant).
        flat = jnp.pad(flat, (0, padded_total - total))
    slab = jnp.reshape(flat, (rows, _LANE))

    # Ragged last block is fine: block_shape stays (block_rows, 128) which
    # satisfies the (8,128) rule; Pallas masks the partial block.
    grid = (-(-rows // block_rows),)

    out_slab = pl.pallas_call(
        _copy_kernel,
        out_shape=jax.ShapeDtypeStruct((rows, _LANE), dtype),
        grid=grid,
        in_specs=[pl.BlockSpec((block_rows, _LANE), lambda i: (i, 0))],
        out_specs=pl.BlockSpec((block_rows, _LANE), lambda i: (i, 0)),
        compiler_params=pltpu.CompilerParams(
            # 'parallel' shards the 1-D grid across v7x's 2 TensorCores
            # (no-op on single-TC v5e/v6e); output blocks are disjoint.
            dimension_semantics=("parallel",),
            vmem_limit_bytes=max(6 * block_bytes, 4 << 20),
        ),
    )(slab)

    out_flat = jnp.reshape(out_slab, (padded_total,))
    if padded_total != total:
        out_flat = out_flat[:total]
    assert out_flat.shape[0] * (1 if out_flat.ndim == 1 else 0) == total or out_flat.size == total
    return jnp.reshape(out_flat, out_shape)


if __name__ == "__main__":
    key0, key1 = jax.random.split(jax.random.PRNGKey(0))

    # Case 1: DQN-style flatten of conv features (NCHW) before the FC head.
    # 2048 f32 elements -> 128-aligned -> no pad/slice, exactly one read + one write.
    x1 = jax.random.normal(key0, (2, 4, 16, 16), dtype=jnp.float32)
    out1 = pallas_reshape(x1, (4 * 16 * 16,), materialize=True, small_fast_path_bytes=0)
    out1 = jax.block_until_ready(out1)
    ref1 = jnp.reshape(x1, (2, 4 * 16 * 16))
    assert out1.shape == (2, 1024) and out1.dtype == x1.dtype
    assert bool(jnp.all(out1 == ref1))

    # Case 2: -1 inference + non-128-multiple element count (ragged/pad path),
    # bf16 exercises the 16-row sublane-packing alignment.
    x2 = jax.random.normal(key1, (2, 3, 5, 7), dtype=jnp.bfloat16)
    out2 = pallas_reshape(x2, (-1, 7), materialize=True, small_fast_path_bytes=0)
    out2 = jax.block_until_ready(out2)
    ref2 = jnp.reshape(x2, (2, 15, 7))
    assert out2.shape == (2, 15, 7) and out2.dtype == x2.dtype
    assert bool(jnp.all(out2 == ref2))

    # Case 3: zero-copy fast path (no kernel launch) — preferred in production.
    out3 = pallas_reshape(x1, (-1,), materialize=False)
    assert bool(jnp.all(out3 == ref1))

    # Case 4: small-size fast path (default threshold) skips the kernel launch.
    out4 = pallas_reshape(x1, (4, 256), materialize=True)
    out4 = jax.block_until_ready(out4)
    assert out4.shape == (2, 4, 256)
    assert bool(jnp.all(jnp.reshape(out4, (2, 1024)) == ref1))

    print("KERNEL_OK")
</pallas_src>

<mosaic_0001>
module attributes {stable_mosaic.version = 11 : i64} {
  func.func @_copy_kernel(%arg0: i32, %arg1: memref<16x128xf32, #tpu.memory_space<vmem>>, %arg2: memref<16x128xf32, #tpu.memory_space<vmem>>) attributes {dimension_semantics = [#tpu.dimension_semantics<parallel>], iteration_bounds = array<i64: 1>, scalar_prefetch = 0 : i64, scratch_operands = 0 : i64, tpu.core_type = #tpu.core_type<tc>, window_params = [{transform_indices = @transform_0, window_bounds = array<i64: 16, 128>}, {transform_indices = @transform_1, window_bounds = array<i64: 16, 128>}]} {
    %c0 = arith.constant 0 : index
    %c0_0 = arith.constant 0 : index
    %0 = vector.load %arg1[%c0, %c0_0] : memref<16x128xf32, #tpu.memory_space<vmem>>, vector<16x128xf32>
    %c0_1 = arith.constant 0 : index
    %c0_2 = arith.constant 0 : index
    %1 = vector.load %arg2[%c0_1, %c0_2] : memref<16x128xf32, #tpu.memory_space<vmem>>, vector<16x128xf32>
    tpu.vector_store %arg2[%c0_1, %c0_2], %0 {strides = array<i32>} : memref<16x128xf32, #tpu.memory_space<vmem>>, vector<16x128xf32>,
    return
  }
  func.func @transform_0(%arg0: i32) -> (i32, i32) {
    %c0_i32 = arith.constant 0 : i32
    %c0_i32_0 = arith.constant 0 : i32
    return %arg0, %c0_i32 : i32, i32
  }
  func.func @transform_1(%arg0: i32) -> (i32, i32) {
    %c0_i32 = arith.constant 0 : i32
    %c0_i32_0 = arith.constant 0 : i32
    return %arg0, %c0_i32 : i32, i32
  }
}

</mosaic_0001>

<llo_original>
// kernel: tpu_custom_call.1
$region0: #{tpu_custom_call.1}
  #allocation0 [shape = 'u32[]', space=smem, size = 0x4, offset = 0x4, fixed_abs, tag = 'smem constant byte address 0x4 - core index']
  #allocation1 [shape = 'u32[72,128]{1,0:T(1,128)}', space=vmem, size = 0x9000, scoped, tag = 'internal scratch']
  %s0 = inlined_call_operand.hbm [shape: f32[16,128], index: 0, kind: input, shape index: {}]
  %s1 = inlined_call_operand.hbm [shape: f32[16,128], index: 1, kind: output, shape index: {}]
  %s2 = sld [smem:[#allocation0]]
  $region18: #{tpu_custom_call.1} parent=0
    _
  %s4 = ssub.s32 1, %s2
  %s5 = scalar_select 0, %s4, %s2
  $region1: #{tpu_custom_call.1} parent=0
    #allocation2 [shape = 'u8[8192]{0}', space=vmem, size = 0x2000, scoped, tag = 'input window, operand 0, single buffered']
    #allocation3 [shape = 's32[1]{0}', space=sflag, size = 0x4, scoped, tag = 'scoped memory for tpu_custom_call.1']
    #allocation4 [shape = 's32[1]{0}', space=sflag, size = 0x4, scoped, tag = 'scoped memory for tpu_custom_call.1']
    #allocation5 [shape = 'u8[8192]{0}', space=vmem, size = 0x2000, scoped, tag = 'output window, operand 0, single buffered']
    %6 = vsyncpa [#allocation3], 0
    %7 = vsyncpa [#allocation4], 0
    // Predicated region
    $region2: #{tpu_custom_call.1} parent=1 // pred_check
      _
    $region3: #{tpu_custom_call.1} parent=1 // pred_check_branch
      %9 = sbr.rel (0) target = $region5
    $region4: #{tpu_custom_call.1} parent=1 // pred_region
      %11 = vsyncadd [#allocation3], 0
      %s12 = sshll.u32 %s0, 4
      %s13 = int_to_ptr.hbm [resolvable:$true] %s12
      %s14 = sshll.u32 [#allocation2], 4
      %s15 = int_to_ptr.vmem [resolvable:$true] %s14
      %20 = dma.hbm_to_vmem [thread:$0]  %s13, 256, %s15, [#allocation3], 128, 128, 8
    $region5: #{tpu_custom_call.1} parent=1 // pred_fallthru
      _
    // Predicated region
    $region6: #{tpu_custom_call.1} parent=1 // pred_check
      _
    $region7: #{tpu_custom_call.1} parent=1 // pred_check_branch
      %22 = sbr.rel (0) target = $region9
    $region8: #{tpu_custom_call.1} parent=1 // pred_region
      %24 = dma.done [#allocation3], 256
    $region9: #{tpu_custom_call.1} parent=1 // pred_fallthru
      _
    %v25 = vld [vmem:[#allocation2] sm:$0xff]
    %v26 = vld [vmem:[#allocation2 + $0x8] sm:$0xff]
    %27 = vst [vmem:[#allocation5] sm:$0xff] %v25
    %28 = vst [vmem:[#allocation5 + $0x8] sm:$0xff] %v26
    // Predicated region
    $region10: #{tpu_custom_call.1} parent=1 // pred_check
      _
    $region11: #{tpu_custom_call.1} parent=1 // pred_check_branch
      %30 = sbr.rel (0) target = $region13
    $region12: #{tpu_custom_call.1} parent=1 // pred_region
      %32 = vsyncadd [#allocation4], 0
      %s33 = sshll.u32 [#allocation5], 4
      %s34 = int_to_ptr.vmem [resolvable:$true] %s33
      %s35 = sshll.u32 %s1, 4
      %s36 = int_to_ptr.hbm [resolvable:$true] %s35
      %41 = dma.vmem_to_hbm [thread:$0]  %s34, 256, %s36, [#allocation4], 128, 128, 8
    $region13: #{tpu_custom_call.1} parent=1 // pred_fallthru
      _
    // Predicated region
    $region14: #{tpu_custom_call.1} parent=1 // pred_check
      _
    $region15: #{tpu_custom_call.1} parent=1 // pred_check_branch
      %43 = sbr.rel (0) target = $region17
    $region16: #{tpu_custom_call.1} parent=1 // pred_region
      %45 = dma.done [#allocation4], 256
    $region17: #{tpu_custom_call.1} parent=1 // pred_fallthru
      _
    %46 = vsyncpa [#allocation3], 1
    %47 = vsyncpa [#allocation4], 1

</llo_original>
